<compile_context>
chip_gen: v6e
topology: v6e:2x2x1
jax: 0.10.0
libtpu: 0.0.40
codegen_flags: <defaults>
</compile_context>

<pallas_src>
import jax
import jax.numpy as jnp
from jax.experimental import pallas as pl
from jax.experimental.pallas import tpu as pltpu


# Tuning knobs for the bandwidth-bound copy.
_MAX_T_TILE = 4096          # lane-tile cap: long contiguous per-row DMA runs
_BLOCK_BYTES = 4 << 20      # ~4 MiB per block -> 16 MiB double-buffered (in+out)
_VMEM_LIMIT_BYTES = 32 << 20  # explicit scoped-VMEM budget (v5e default is only 16 MiB)
_MIN_GRID_STEPS = 8         # keep >=8 parallel grid steps so v7x's 2 TCs both get work
_SMALL_BYTES = 4 << 20      # below this, let XLA slice/fuse instead of a Pallas copy
_MIN_T_OUT = 128            # below this, output lane utilization collapses


def _round_up(x: int, m: int) -> int:
    return ((x + m - 1) // m) * m


def _copy_kernel(x_ref, o_ref):
    # Pure full-block memcpy; the trim is expressed entirely by the BlockSpecs
    # (output extent is t_out; edge blocks are masked by Pallas).
    o_ref[...] = x_ref[...]


def chomp1d(x: jax.Array, chomp_size: int, *, force_pallas: bool = False) -> jax.Array:
    """Drop the last `chomp_size` steps along the last axis of an (N, C, T) array."""
    assert x.ndim == 3, "expected (N, C, T)"
    n, c, t = x.shape
    assert 0 < chomp_size < t, "chomp_size must be in (0, T)"
    t_out = t - chomp_size
    itemsize = jnp.dtype(x.dtype).itemsize

    # Fast path: short-T / small inputs are better served by a plain (fusable)
    # XLA slice than a Pallas copy with masked <128-lane stores.
    if not force_pallas and (t_out < _MIN_T_OUT or x.size * itemsize < _SMALL_BYTES):
        return jax.lax.slice(x, (0, 0, 0), (n, c, t_out))

    # Flatten (N, C) -> rows: dense sublane axis, deeper grid. Metadata-only for
    # the default (N, C, T) layout.
    nc = n * c
    x2 = x.reshape(nc, t)

    sub_mult = 8 * max(1, 4 // itemsize)  # f32: 8, bf16: 16, int8/fp8: 32

    # Grow the T (lane) tile first: longer contiguous per-row HBM runs per DMA
    # descriptor and only one masked edge tile along T.
    t_tile = min(_round_up(t_out, 128), _MAX_T_TILE)
    t_steps = pl.cdiv(t_out, t_tile)

    # Row tile from the remaining per-block byte budget ...
    target_rows = (_BLOCK_BYTES // (t_tile * itemsize)) // sub_mult * sub_mult
    target_rows = max(sub_mult, target_rows)
    # ... capped so the total (parallel) grid keeps >= _MIN_GRID_STEPS steps
    # (2-TC sharding on v7x, and enough steps to pipeline).
    needed_row_steps = pl.cdiv(_MIN_GRID_STEPS, t_steps)
    row_cap = max(sub_mult, _round_up(pl.cdiv(nc, needed_row_steps), sub_mult))
    r_tile = min(target_rows, row_cap, _round_up(nc, sub_mult))

    grid = (pl.cdiv(nc, r_tile), t_steps)

    out2 = pl.pallas_call(
        _copy_kernel,
        out_shape=jax.ShapeDtypeStruct((nc, t_out), x.dtype),
        grid_spec=pltpu.PrefetchScalarGridSpec(
            num_scalar_prefetch=0,
            grid=grid,
            in_specs=[pl.BlockSpec((r_tile, t_tile), lambda i, j: (i, j))],
            out_specs=pl.BlockSpec((r_tile, t_tile), lambda i, j: (i, j)),
        ),
        compiler_params=pltpu.CompilerParams(
            dimension_semantics=("parallel", "parallel"),
            vmem_limit_bytes=_VMEM_LIMIT_BYTES,
        ),
        cost_estimate=pl.CostEstimate(
            flops=0,
            transcendentals=0,
            bytes_accessed=2 * nc * t_out * itemsize,
        ),
    )(x2)

    return out2.reshape(n, c, t_out)


if __name__ == "__main__":
    # Chomp1d has no learnable parameters; only chomp_size from __init__.
    key = jax.random.PRNGKey(0)

    # Primary demo (module-consistent small shape): (N=2, C=4, T=16), chomp_size=3.
    chomp_size = 3
    x = jax.random.normal(key, (2, 4, 16), dtype=jnp.float32)
    ref = x[:, :, :-chomp_size]

    # Auto path: small problem -> fused XLA slice fallback.
    out_auto = jax.block_until_ready(chomp1d(x, chomp_size))
    assert out_auto.shape == (2, 4, 16 - chomp_size), out_auto.shape
    assert out_auto.dtype == x.dtype
    assert jnp.array_equal(out_auto, ref)

    # Forced Pallas path at the same small shape (exercises the kernel itself).
    out_pl = jax.block_until_ready(chomp1d(x, chomp_size, force_pallas=True))
    assert out_pl.shape == ref.shape
    assert jnp.array_equal(out_pl, ref)

    # Secondary check: multi-step grid with masked edge tiles on both axes.
    k2 = jax.random.PRNGKey(1)
    x2 = jax.random.normal(k2, (3, 40, 200), dtype=jnp.float32)
    out2 = jax.block_until_ready(chomp1d(x2, 7, force_pallas=True))
    assert jnp.array_equal(out2, x2[:, :, :-7])

    print("KERNEL_OK")
</pallas_src>

<mosaic_0001>
module attributes {stable_mosaic.version = 11 : i64} {
  func.func @_copy_kernel(%arg0: i32, %arg1: i32, %arg2: memref<8x128xf32, #tpu.memory_space<vmem>>, %arg3: memref<8x128xf32, #tpu.memory_space<vmem>>) attributes {dimension_semantics = [#tpu.dimension_semantics<parallel>, #tpu.dimension_semantics<parallel>], iteration_bounds = array<i64: 1, 1>, scalar_prefetch = 0 : i64, scratch_operands = 0 : i64, tpu.core_type = #tpu.core_type<tc>, window_params = [{transform_indices = @transform_0, window_bounds = array<i64: 8, 128>}, {transform_indices = @transform_1, window_bounds = array<i64: 8, 128>}]} {
    %c0 = arith.constant 0 : index
    %c0_0 = arith.constant 0 : index
    %0 = vector.load %arg2[%c0, %c0_0] : memref<8x128xf32, #tpu.memory_space<vmem>>, vector<8x128xf32>
    %c0_1 = arith.constant 0 : index
    %c0_2 = arith.constant 0 : index
    %1 = vector.load %arg3[%c0_1, %c0_2] : memref<8x128xf32, #tpu.memory_space<vmem>>, vector<8x128xf32>
    tpu.vector_store %arg3[%c0_1, %c0_2], %0 {strides = array<i32>} : memref<8x128xf32, #tpu.memory_space<vmem>>, vector<8x128xf32>,
    return
  }
  func.func @transform_0(%arg0: i32, %arg1: i32) -> (i32, i32) {
    %c0_i32 = arith.constant 0 : i32
    return %arg0, %arg1 : i32, i32
  }
  func.func @transform_1(%arg0: i32, %arg1: i32) -> (i32, i32) {
    %c0_i32 = arith.constant 0 : i32
    return %arg0, %arg1 : i32, i32
  }
}

</mosaic_0001>

<llo_original>
// kernel: tpu_custom_call.1
$region0: #{tpu_custom_call.1}
  #allocation0 [shape = 'u32[]', space=smem, size = 0x4, offset = 0x4, fixed_abs, tag = 'smem constant byte address 0x4 - core index']
  #allocation1 [shape = 'u32[144,128]{1,0:T(1,128)}', space=vmem, size = 0x12000, scoped, tag = 'internal scratch']
  %s0 = inlined_call_operand.hbm [shape: f32[8,16], index: 0, kind: input, shape index: {}]
  %s1 = inlined_call_operand.hbm [shape: f32[8,13], index: 1, kind: output, shape index: {}]
  %s2 = sld [smem:[#allocation0]]
  $region18: #{tpu_custom_call.1} parent=0
    _
  %s4 = ssub.s32 1, %s2
  %s5 = scalar_select 0, %s4, %s2
  $region1: #{tpu_custom_call.1} parent=0
    #allocation2 [shape = 'u8[4096]{0}', space=vmem, size = 0x1000, scoped, tag = 'input window, operand 0, single buffered']
    #allocation3 [shape = 's32[1]{0}', space=sflag, size = 0x4, scoped, tag = 'scoped memory for tpu_custom_call.1']
    #allocation4 [shape = 's32[1]{0}', space=sflag, size = 0x4, scoped, tag = 'scoped memory for tpu_custom_call.1']
    #allocation5 [shape = 'u8[4096]{0}', space=vmem, size = 0x1000, scoped, tag = 'output window, operand 0, single buffered']
    %6 = vsyncpa [#allocation3], 0
    %7 = vsyncpa [#allocation4], 0
    // Predicated region
    $region2: #{tpu_custom_call.1} parent=1 // pred_check
      _
    $region3: #{tpu_custom_call.1} parent=1 // pred_check_branch
      %9 = sbr.rel (0) target = $region5
    $region4: #{tpu_custom_call.1} parent=1 // pred_region
      %s11 = ssub.s32 128, 128
      %12 = vsyncadd [#allocation3], %s11
      %s14 = sshll.u32 [#allocation2], 4
      %s15 = int_to_ptr.vmem [resolvable:$true] %s14
      %17 = dma.hbm_to_vmem [thread:$0]  %s0, 128, %s15, [#allocation3]
    $region5: #{tpu_custom_call.1} parent=1 // pred_fallthru
      _
    // Predicated region
    $region6: #{tpu_custom_call.1} parent=1 // pred_check
      _
    $region7: #{tpu_custom_call.1} parent=1 // pred_check_branch
      %19 = sbr.rel (0) target = $region9
    $region8: #{tpu_custom_call.1} parent=1 // pred_region
      %20 = dma.done [#allocation3], 128
    $region9: #{tpu_custom_call.1} parent=1 // pred_fallthru
      _
    %v21 = vld [vmem:[#allocation2] sm:$0xff]
    %22 = vst [vmem:[#allocation5] sm:$0xff] %v21
    // Predicated region
    $region10: #{tpu_custom_call.1} parent=1 // pred_check
      _
    $region11: #{tpu_custom_call.1} parent=1 // pred_check_branch
      %24 = sbr.rel (0) target = $region13
    $region12: #{tpu_custom_call.1} parent=1 // pred_region
      %s26 = ssub.s32 128, 128
      %27 = vsyncadd [#allocation4], %s26
      %s29 = sshll.u32 [#allocation5], 4
      %s30 = int_to_ptr.vmem [resolvable:$true] %s29
      %32 = dma.vmem_to_hbm [thread:$0]  %s30, 128, %s1, [#allocation4]
    $region13: #{tpu_custom_call.1} parent=1 // pred_fallthru
      _
    // Predicated region
    $region14: #{tpu_custom_call.1} parent=1 // pred_check
      _
    $region15: #{tpu_custom_call.1} parent=1 // pred_check_branch
      %34 = sbr.rel (0) target = $region17
    $region16: #{tpu_custom_call.1} parent=1 // pred_region
      %35 = dma.done [#allocation4], 128
    $region17: #{tpu_custom_call.1} parent=1 // pred_fallthru
      _
    %36 = vsyncpa [#allocation3], 1
    %37 = vsyncpa [#allocation4], 1

</llo_original>
